<compile_context>
chip_gen: v5e
topology: v5e:2x2
jax: 0.10.0
libtpu: 0.0.40
codegen_flags: <defaults>
</compile_context>

<pallas_src>
import functools

import jax
import jax.numpy as jnp
from jax.experimental import pallas as pl
from jax.experimental.pallas import tpu as pltpu

LANE = 128        # vreg lane width (output last dim padded to this)
SUBLANE = 8       # f32 sublane group (second-to-last dim alignment)
MAX_M_TILE = 512  # rows per grid step (256-512 ~ HBM roofline per review)


def _round_up(n, m):
    return ((n + m - 1) // m) * m


def _nbytes(shape, dtype):
    n = 1
    for d in shape:
        n *= int(d)
    return n * jnp.dtype(dtype).itemsize


# ----------------------------- Pallas kernel ------------------------------

def _fused_mlp_kernel(x_ref, *refs, num_layers, compute_dtype):
    """Fused MLP body: refs = (w0, b0, ..., w_{L-1}, b_{L-1}, o_ref).

    One M-tile of activations stays resident in VMEM/vregs across all layers;
    weights are whole-array VMEM blocks shared across grid steps.  Matmuls run
    on the MXU with f32 accumulation; ReLU is free VPU filler next to the MXU.
    """
    o_ref = refs[-1]
    h = x_ref[...]
    for i in range(num_layers):
        w = refs[2 * i][...]
        b = refs[2 * i + 1][...]                       # (1, N) — broadcast add
        h = jnp.dot(h.astype(compute_dtype), w,
                    preferred_element_type=jnp.float32) + b.astype(jnp.float32)
        if i != num_layers - 1:
            h = jnp.maximum(h, 0.0)
    o_ref[...] = h.astype(o_ref.dtype)


def mlp_forward(params, x, *, output_size):
    """Runs the whole MLP in a single pallas_call.

    params: list of (w, b), w: (in, out), b: (1, out); the final layer's out
            dim is already lane-padded (done once in make_mlp_params).
    x: (batch, input_size).  Returns (batch, output_size) in f32.
    """
    M, K = x.shape
    num_layers = len(params)
    out_pad = params[-1][0].shape[1]           # already a multiple of LANE
    param_dtype = params[0][0].dtype

    # Batch tiling: largest sublane-aligned tile up to MAX_M_TILE.
    TM = min(_round_up(max(M, SUBLANE), SUBLANE), MAX_M_TILE)
    M_pad = _round_up(max(M, SUBLANE), TM)
    grid = (M_pad // TM,)

    x_p = jnp.pad(x, ((0, M_pad - M), (0, 0))) if M_pad != M else x

    # Input x is row-tiled; weights/biases are whole-array blocks that stay
    # VMEM-resident across the M grid steps (constant index_map).
    in_specs = [pl.BlockSpec((TM, K), lambda i: (i, 0))]
    flat_inputs = [x_p]
    for (w, b) in params:
        in_specs += [
            pl.BlockSpec(w.shape, lambda i: (0, 0)),
            pl.BlockSpec(b.shape, lambda i: (0, 0)),
        ]
        flat_inputs += [w, b]
    out_spec = pl.BlockSpec((TM, out_pad), lambda i: (i, 0))

    # VMEM budget: double-buffered x/out tiles + (conservatively 2x) resident
    # weights, plus margin.  Scoped defaults (16/32 MiB) are far below need
    # once layer_size grows, so set it explicitly.
    vmem_bytes = 2 * (_nbytes((TM, K), x.dtype) +
                      _nbytes((TM, out_pad), jnp.float32))
    for (w, b) in params:
        vmem_bytes += 2 * (_nbytes(w.shape, w.dtype) + _nbytes(b.shape, b.dtype))
    vmem_bytes = min(vmem_bytes + (4 << 20), 128 << 20)

    kernel = functools.partial(_fused_mlp_kernel,
                               num_layers=num_layers,
                               compute_dtype=param_dtype)
    out_p = pl.pallas_call(
        kernel,
        out_shape=jax.ShapeDtypeStruct((M_pad, out_pad), jnp.float32),
        grid=grid,
        in_specs=in_specs,
        out_specs=out_spec,
        compiler_params=pltpu.CompilerParams(
            dimension_semantics=("parallel",),      # M axis: shard across TCs
            vmem_limit_bytes=int(vmem_bytes)),
    )(*flat_inputs)

    return out_p[:M, :output_size]


# -------------------------- Parameter construction ------------------------

def _init_linear_params(key, in_features, out_features):
    """PyTorch nn.Linear default init: U(-1/sqrt(fan_in), 1/sqrt(fan_in))."""
    kw, kb = jax.random.split(key)
    bound = 1.0 / jnp.sqrt(jnp.float32(in_features))
    # Stored transposed as (in, out) so the kernel computes y = x @ W + b.
    w = jax.random.uniform(kw, (in_features, out_features),
                           minval=-bound, maxval=bound, dtype=jnp.float32)
    b = jax.random.uniform(kb, (1, out_features),
                           minval=-bound, maxval=bound, dtype=jnp.float32)
    return w, b


def make_mlp_params(key, input_size, layers_num, layer_size, output_size,
                    param_dtype=jnp.float32):
    """Builds the MLP parameters matching the PyTorch module.

    Padding policy (done ONCE here, never per forward call):
      * only the FINAL layer's output dim is zero-padded to a multiple of 128
        (lane-dense output stores); zero cols/bias are exact and sliced off
        by the wrapper.
      * every other dim stays at its logical size (no HBM DMA inflation).
    """
    params = []
    keys = jax.random.split(key, layers_num + 2)

    # First layer: input_size -> layer_size, followed by ReLU.
    params.append(_init_linear_params(keys[0], input_size, layer_size))
    # Hidden layers: layer_size -> layer_size, each followed by ReLU.
    for i in range(layers_num):
        params.append(_init_linear_params(keys[1 + i], layer_size, layer_size))
    # Final layer: layer_size -> output_size, weight & bias scaled by 0.01.
    w, b = _init_linear_params(keys[-1], layer_size, output_size)
    w, b = w * 0.01, b * 0.01
    out_pad = _round_up(output_size, LANE)
    w = jnp.pad(w, ((0, 0), (0, out_pad - output_size)))
    b = jnp.pad(b, ((0, 0), (0, out_pad - output_size)))
    params.append((w, b))

    return [(wi.astype(param_dtype), bi.astype(param_dtype))
            for (wi, bi) in params]


# --------------------------------- Main ------------------------------------

if __name__ == "__main__":
    input_size = 16
    layers_num = 2
    layer_size = 32
    output_size = 8
    batch = 4

    key = jax.random.PRNGKey(0)
    kx, kp = jax.random.split(key)
    x = jax.random.normal(kx, (batch, input_size), dtype=jnp.float32)

    fwd = jax.jit(functools.partial(mlp_forward, output_size=output_size))

    def ref_mlp(ps, xv):
        h = xv
        for idx, (w, b) in enumerate(ps):
            h = jnp.dot(h.astype(w.dtype), w,
                        preferred_element_type=jnp.float32) + b.astype(jnp.float32)
            if idx != len(ps) - 1:
                h = jnp.maximum(h, 0.0)
        return h[:, :output_size]

    # --- f32 path (exact vs. pure-JAX reference) ---
    params = make_mlp_params(kp, input_size, layers_num, layer_size, output_size)
    out = jax.block_until_ready(fwd(params, x))
    assert out.shape == (batch, output_size)
    assert bool(jnp.all(jnp.isfinite(out)))
    ref = ref_mlp(params, x)
    assert bool(jnp.allclose(out, ref, atol=1e-5, rtol=1e-5))

    # --- bf16 weights (halved weight HBM bytes; f32 accumulation kept) ---
    params_bf16 = make_mlp_params(kp, input_size, layers_num, layer_size,
                                  output_size, param_dtype=jnp.bfloat16)
    out_bf16 = jax.block_until_ready(fwd(params_bf16, x))
    ref_bf16 = ref_mlp(params_bf16, x)
    assert bool(jnp.allclose(out_bf16, ref_bf16, atol=2e-2, rtol=2e-2))

    print("KERNEL_OK")
</pallas_src>

<mosaic_0001>
module attributes {stable_mosaic.version = 11 : i64} {
  func.func @_fused_mlp_kernel(%arg0: i32, %arg1: memref<8x16xf32, #tpu.memory_space<vmem>>, %arg2: memref<16x32xf32, #tpu.memory_space<vmem>>, %arg3: memref<1x32xf32, #tpu.memory_space<vmem>>, %arg4: memref<32x32xf32, #tpu.memory_space<vmem>>, %arg5: memref<1x32xf32, #tpu.memory_space<vmem>>, %arg6: memref<32x32xf32, #tpu.memory_space<vmem>>, %arg7: memref<1x32xf32, #tpu.memory_space<vmem>>, %arg8: memref<32x128xf32, #tpu.memory_space<vmem>>, %arg9: memref<1x128xf32, #tpu.memory_space<vmem>>, %arg10: memref<8x128xf32, #tpu.memory_space<vmem>>) attributes {dimension_semantics = [#tpu.dimension_semantics<parallel>], iteration_bounds = array<i64: 1>, scalar_prefetch = 0 : i64, scratch_operands = 0 : i64, tpu.core_type = #tpu.core_type<tc>, window_params = [{transform_indices = @transform_0, window_bounds = array<i64: 8, 16>}, {pipeline_mode = #tpu.pipeline_mode<synchronous>, transform_indices = @transform_1, window_bounds = array<i64: 16, 32>}, {pipeline_mode = #tpu.pipeline_mode<synchronous>, transform_indices = @transform_2, window_bounds = array<i64: 1, 32>}, {pipeline_mode = #tpu.pipeline_mode<synchronous>, transform_indices = @transform_3, window_bounds = array<i64: 32, 32>}, {pipeline_mode = #tpu.pipeline_mode<synchronous>, transform_indices = @transform_4, window_bounds = array<i64: 1, 32>}, {pipeline_mode = #tpu.pipeline_mode<synchronous>, transform_indices = @transform_5, window_bounds = array<i64: 32, 32>}, {pipeline_mode = #tpu.pipeline_mode<synchronous>, transform_indices = @transform_6, window_bounds = array<i64: 1, 32>}, {pipeline_mode = #tpu.pipeline_mode<synchronous>, transform_indices = @transform_7, window_bounds = array<i64: 32, 128>}, {pipeline_mode = #tpu.pipeline_mode<synchronous>, transform_indices = @transform_8, window_bounds = array<i64: 1, 128>}, {transform_indices = @transform_9, window_bounds = array<i64: 8, 128>}]} {
    %c0 = arith.constant 0 : index
    %c0_0 = arith.constant 0 : index
    %0 = vector.load %arg1[%c0, %c0_0] : memref<8x16xf32, #tpu.memory_space<vmem>>, vector<8x16xf32>
    %c0_1 = arith.constant 0 : index
    %c0_2 = arith.constant 0 : index
    %1 = vector.load %arg2[%c0_1, %c0_2] : memref<16x32xf32, #tpu.memory_space<vmem>>, vector<16x32xf32>
    %c0_3 = arith.constant 0 : index
    %c0_4 = arith.constant 0 : index
    %2 = vector.load %arg3[%c0_3, %c0_4] : memref<1x32xf32, #tpu.memory_space<vmem>>, vector<1x32xf32>
    %cst = arith.constant dense<0.000000e+00> : vector<8x32xf32>
    %3 = tpu.matmul %0, %1, %cst {dimension_numbers = #tpu.dot_dimension_numbers<[1], [0], [0], [1], [0, 0, 1, 1], [], []>} : vector<8x16xf32>, vector<16x32xf32>, vector<8x32xf32> -> vector<8x32xf32>
    %4 = vector.broadcast %2 : vector<1x32xf32> to vector<8x32xf32>
    %5 = arith.addf %3, %4 : vector<8x32xf32>
    %cst_5 = arith.constant 0.000000e+00 : f32
    %6 = vector.broadcast %cst_5 : f32 to vector<8x32xf32>
    %7 = arith.maximumf %5, %6 : vector<8x32xf32>
    %c0_6 = arith.constant 0 : index
    %c0_7 = arith.constant 0 : index
    %8 = vector.load %arg4[%c0_6, %c0_7] : memref<32x32xf32, #tpu.memory_space<vmem>>, vector<32x32xf32>
    %c0_8 = arith.constant 0 : index
    %c0_9 = arith.constant 0 : index
    %9 = vector.load %arg5[%c0_8, %c0_9] : memref<1x32xf32, #tpu.memory_space<vmem>>, vector<1x32xf32>
    %cst_10 = arith.constant dense<0.000000e+00> : vector<8x32xf32>
    %10 = tpu.matmul %7, %8, %cst_10 {dimension_numbers = #tpu.dot_dimension_numbers<[1], [0], [0], [1], [0, 0, 1, 1], [], []>} : vector<8x32xf32>, vector<32x32xf32>, vector<8x32xf32> -> vector<8x32xf32>
    %11 = vector.broadcast %9 : vector<1x32xf32> to vector<8x32xf32>
    %12 = arith.addf %10, %11 : vector<8x32xf32>
    %cst_11 = arith.constant 0.000000e+00 : f32
    %13 = vector.broadcast %cst_11 : f32 to vector<8x32xf32>
    %14 = arith.maximumf %12, %13 : vector<8x32xf32>
    %c0_12 = arith.constant 0 : index
    %c0_13 = arith.constant 0 : index
    %15 = vector.load %arg6[%c0_12, %c0_13] : memref<32x32xf32, #tpu.memory_space<vmem>>, vector<32x32xf32>
    %c0_14 = arith.constant 0 : index
    %c0_15 = arith.constant 0 : index
    %16 = vector.load %arg7[%c0_14, %c0_15] : memref<1x32xf32, #tpu.memory_space<vmem>>, vector<1x32xf32>
    %cst_16 = arith.constant dense<0.000000e+00> : vector<8x32xf32>
    %17 = tpu.matmul %14, %15, %cst_16 {dimension_numbers = #tpu.dot_dimension_numbers<[1], [0], [0], [1], [0, 0, 1, 1], [], []>} : vector<8x32xf32>, vector<32x32xf32>, vector<8x32xf32> -> vector<8x32xf32>
    %18 = vector.broadcast %16 : vector<1x32xf32> to vector<8x32xf32>
    %19 = arith.addf %17, %18 : vector<8x32xf32>
    %cst_17 = arith.constant 0.000000e+00 : f32
    %20 = vector.broadcast %cst_17 : f32 to vector<8x32xf32>
    %21 = arith.maximumf %19, %20 : vector<8x32xf32>
    %c0_18 = arith.constant 0 : index
    %c0_19 = arith.constant 0 : index
    %22 = vector.load %arg8[%c0_18, %c0_19] : memref<32x128xf32, #tpu.memory_space<vmem>>, vector<32x128xf32>
    %c0_20 = arith.constant 0 : index
    %c0_21 = arith.constant 0 : index
    %23 = vector.load %arg9[%c0_20, %c0_21] : memref<1x128xf32, #tpu.memory_space<vmem>>, vector<1x128xf32>
    %cst_22 = arith.constant dense<0.000000e+00> : vector<8x128xf32>
    %24 = tpu.matmul %21, %22, %cst_22 {dimension_numbers = #tpu.dot_dimension_numbers<[1], [0], [0], [1], [0, 0, 1, 1], [], []>} : vector<8x32xf32>, vector<32x128xf32>, vector<8x128xf32> -> vector<8x128xf32>
    %25 = vector.broadcast %23 : vector<1x128xf32> to vector<8x128xf32>
    %26 = arith.addf %24, %25 : vector<8x128xf32>
    %c0_23 = arith.constant 0 : index
    %c0_24 = arith.constant 0 : index
    %27 = vector.load %arg10[%c0_23, %c0_24] : memref<8x128xf32, #tpu.memory_space<vmem>>, vector<8x128xf32>
    tpu.vector_store %arg10[%c0_23, %c0_24], %26 {strides = array<i32>} : memref<8x128xf32, #tpu.memory_space<vmem>>, vector<8x128xf32>,
    return
  }
  func.func @transform_0(%arg0: i32) -> (i32, i32) {
    %c0_i32 = arith.constant 0 : i32
    %c0_i32_0 = arith.constant 0 : i32
    return %arg0, %c0_i32 : i32, i32
  }
  func.func @transform_1(%arg0: i32) -> (i32, i32) {
    %c0_i32 = arith.constant 0 : i32
    %c0_i32_0 = arith.constant 0 : i32
    %c0_i32_1 = arith.constant 0 : i32
    return %c0_i32, %c0_i32_0 : i32, i32
  }
  func.func @transform_2(%arg0: i32) -> (i32, i32) {
    %c0_i32 = arith.constant 0 : i32
    %c0_i32_0 = arith.constant 0 : i32
    %c0_i32_1 = arith.constant 0 : i32
    return %c0_i32, %c0_i32_0 : i32, i32
  }
  func.func @transform_3(%arg0: i32) -> (i32, i32) {
    %c0_i32 = arith.constant 0 : i32
    %c0_i32_0 = arith.constant 0 : i32
    %c0_i32_1 = arith.constant 0 : i32
    return %c0_i32, %c0_i32_0 : i32, i32
  }
  func.func @transform_4(%arg0: i32) -> (i32, i32) {
    %c0_i32 = arith.constant 0 : i32
    %c0_i32_0 = arith.constant 0 : i32
    %c0_i32_1 = arith.constant 0 : i32
    return %c0_i32, %c0_i32_0 : i32, i32
  }
  func.func @transform_5(%arg0: i32) -> (i32, i32) {
    %c0_i32 = arith.constant 0 : i32
    %c0_i32_0 = arith.constant 0 : i32
    %c0_i32_1 = arith.constant 0 : i32
    return %c0_i32, %c0_i32_0 : i32, i32
  }
  func.func @transform_6(%arg0: i32) -> (i32, i32) {
    %c0_i32 = arith.constant 0 : i32
    %c0_i32_0 = arith.constant 0 : i32
    %c0_i32_1 = arith.constant 0 : i32
    return %c0_i32, %c0_i32_0 : i32, i32
  }
  func.func @transform_7(%arg0: i32) -> (i32, i32) {
    %c0_i32 = arith.constant 0 : i32
    %c0_i32_0 = arith.constant 0 : i32
    %c0_i32_1 = arith.constant 0 : i32
    return %c0_i32, %c0_i32_0 : i32, i32
  }
  func.func @transform_8(%arg0: i32) -> (i32, i32) {
    %c0_i32 = arith.constant 0 : i32
    %c0_i32_0 = arith.constant 0 : i32
    %c0_i32_1 = arith.constant 0 : i32
    return %c0_i32, %c0_i32_0 : i32, i32
  }
  func.func @transform_9(%arg0: i32) -> (i32, i32) {
    %c0_i32 = arith.constant 0 : i32
    %c0_i32_0 = arith.constant 0 : i32
    return %arg0, %c0_i32 : i32, i32
  }
}

</mosaic_0001>

<llo_original>
// kernel: mlp_forward.1
$region0: #{mlp_forward.1}
  #allocation0 [shape = 'u32[]', space=smem, size = 0x4, offset = 0x4, fixed_abs, tag = 'smem constant byte address 0x4 - core index']
  #allocation1 [shape = 'u32[72,128]{1,0:T(1,128)}', space=vmem, size = 0x9000, scoped, tag = 'internal scratch']
  %s0 = inlined_call_operand.vmem [shape: f32[8,16], index: 0, kind: input, shape index: {}]
  %s1 = inlined_call_operand.hbm [shape: f32[16,32], index: 1, kind: input, shape index: {}]
  %s2 = inlined_call_operand.vmem [shape: f32[1,32], index: 2, kind: input, shape index: {}]
  %s3 = inlined_call_operand.hbm [shape: f32[32,32], index: 3, kind: input, shape index: {}]
  %s4 = inlined_call_operand.vmem [shape: f32[1,32], index: 4, kind: input, shape index: {}]
  %s5 = inlined_call_operand.hbm [shape: f32[32,32], index: 5, kind: input, shape index: {}]
  %s6 = inlined_call_operand.vmem [shape: f32[1,32], index: 6, kind: input, shape index: {}]
  %s7 = inlined_call_operand.hbm [shape: f32[32,128], index: 7, kind: input, shape index: {}]
  %s8 = inlined_call_operand.vmem [shape: f32[1,128], index: 8, kind: input, shape index: {}]
  %s9 = inlined_call_operand.vmem [shape: f32[8,128], index: 9, kind: output, shape index: {}]
  %s10 = sld [smem:[#allocation0]]
  $region62: #{mlp_forward.1} parent=0
    _
  %s12 = ssub.s32 1, %s10
  %s13 = scalar_select 0, %s12, %s10
  $region1: #{mlp_forward.1} parent=0
    #allocation2 [shape = 'u8[8192]{0}', space=vmem, size = 0x2000, scoped, tag = 'input window, operand 1, single buffered']
    #allocation3 [shape = 's32[1]{0}', space=sflag, size = 0x4, scoped, tag = 'scoped memory for mlp_forward.1']
    #allocation4 [shape = 'u8[16384]{0}', space=vmem, size = 0x4000, scoped, tag = 'input window, operand 3, single buffered']
    #allocation5 [shape = 's32[1]{0}', space=sflag, size = 0x4, scoped, tag = 'scoped memory for mlp_forward.1']
    #allocation6 [shape = 'u8[16384]{0}', space=vmem, size = 0x4000, scoped, tag = 'input window, operand 5, single buffered']
    #allocation7 [shape = 'u8[16384]{0}', space=vmem, size = 0x4000, scoped, tag = 'input window, operand 7, single buffered']
    #allocation8 [shape = 's32[1]{0}', space=sflag, size = 0x4, scoped, tag = 'scoped memory for mlp_forward.1']
    %14 = vsyncpa [#allocation3], 0
    %15 = vsyncpa [#allocation5], 0
    %16 = vsyncpa [#allocation8], 0
    // Predicated region
    $region2: #{mlp_forward.1} parent=1 // pred_check
      _
    $region3: #{mlp_forward.1} parent=1 // pred_check_branch
      %18 = sbr.rel (0) target = $region5
    $region4: #{mlp_forward.1} parent=1 // pred_region
      _
    $region5: #{mlp_forward.1} parent=1 // pred_fallthru
      _
    // Predicated region
    $region6: #{mlp_forward.1} parent=1 // pred_check
      _
    $region7: #{mlp_forward.1} parent=1 // pred_check_branch
      %20 = sbr.rel (0) target = $region9
    $region8: #{mlp_forward.1} parent=1 // pred_region
      %22 = vsyncadd [#allocation3], 0
      %s23 = sshll.u32 %s1, 4
      %s24 = int_to_ptr.hbm [resolvable:$true] %s23
      %s25 = sshll.u32 [#allocation2], 4
      %s26 = int_to_ptr.vmem [resolvable:$true] %s25
      %31 = dma.hbm_to_vmem [thread:$0]  %s24, 256, %s26, [#allocation3], 128, 128, 8
    $region9: #{mlp_forward.1} parent=1 // pred_fallthru
      _
    // Predicated region
    $region10: #{mlp_forward.1} parent=1 // pred_check
      _
    $region11: #{mlp_forward.1} parent=1 // pred_check_branch
      %33 = sbr.rel (0) target = $region13
    $region12: #{mlp_forward.1} parent=1 // pred_region
      _
    $region13: #{mlp_forward.1} parent=1 // pred_fallthru
      _
    // Predicated region
    $region14: #{mlp_forward.1} parent=1 // pred_check
      _
    $region15: #{mlp_forward.1} parent=1 // pred_check_branch
      %35 = sbr.rel (0) target = $region17
    $region16: #{mlp_forward.1} parent=1 // pred_region
      %37 = vsyncadd [#allocation5], 0
      %s38 = sshll.u32 %s3, 4
      %s39 = int_to_ptr.hbm [resolvable:$true] %s38
      %s40 = sshll.u32 [#allocation4], 4
      %s41 = int_to_ptr.vmem [resolvable:$true] %s40
      %46 = dma.hbm_to_vmem [thread:$0]  %s39, 512, %s41, [#allocation5], 128, 128, 8
    $region17: #{mlp_forward.1} parent=1 // pred_fallthru
      _
    // Predicated region
    $region18: #{mlp_forward.1} parent=1 // pred_check
      _
    $region19: #{mlp_forward.1} parent=1 // pred_check_branch
      %48 = sbr.rel (0) target = $region21
    $region20: #{mlp_forward.1} parent=1 // pred_region
      _
    $region21: #{mlp_forward.1} parent=1 // pred_fallthru
      _
    // Predicated region
    $region22: #{mlp_forward.1} parent=1 // pred_check
      _
    $region23: #{mlp_forward.1} parent=1 // pred_check_branch
      %50 = sbr.rel (0) target = $region25
    $region24: #{mlp_forward.1} parent=1 // pred_region
      %52 = vsyncadd [#allocation5], 0
      %s53 = sshll.u32 %s5, 4
      %s54 = int_to_ptr.hbm [resolvable:$true] %s53
      %s55 = sshll.u32 [#allocation6], 4
      %s56 = int_to_ptr.vmem [resolvable:$true] %s55
      %61 = dma.hbm_to_vmem [thread:$0]  %s54, 512, %s56, [#allocation5], 128, 128, 8
    $region25: #{mlp_forward.1} parent=1 // pred_fallthru
      _
    // Predicated region
    $region26: #{mlp_forward.1} parent=1 // pred_check
      _
    $region27: #{mlp_forward.1} parent=1 // pred_check_branch
      %63 = sbr.rel (0) target = $region29
    $region28: #{mlp_forward.1} parent=1 // pred_region
      _
    $region29: #{mlp_forward.1} parent=1 // pred_fallthru
      _
    // Predicated region
    $region30: #{mlp_forward.1} parent=1 // pred_check
      _
    $region31: #{mlp_forward.1} parent=1 // pred_check_branch
      %65 = sbr.rel (0) target = $region33
    $region32: #{mlp_forward.1} parent=1 // pred_region
      %67 = vsyncadd [#allocation8], 0
      %s68 = sshll.u32 %s7, 4
      %s69 = int_to_ptr.hbm [resolvable:$true] %s68
      %s70 = sshll.u32 [#allocation7], 4
      %s71 = int_to_ptr.vmem [resolvable:$true] %s70
      %76 = dma.hbm_to_vmem [thread:$0]  %s69, 512, %s71, [#allocation8], 128, 128, 8
    $region33: #{mlp_forward.1} parent=1 // pred_fallthru
      _
    // Predicated region
    $region34: #{mlp_forward.1} parent=1 // pred_check
      _
    $region35: #{mlp_forward.1} parent=1 // pred_check_branch
      %78 = sbr.rel (0) target = $region37
    $region36: #{mlp_forward.1} parent=1 // pred_region
      _
    $region37: #{mlp_forward.1} parent=1 // pred_fallthru
      _
    // Predicated region
    $region38: #{mlp_forward.1} parent=1 // pred_check
      _
    $region39: #{mlp_forward.1} parent=1 // pred_check_branch
      %80 = sbr.rel (0) target = $region41
    $region40: #{mlp_forward.1} parent=1 // pred_region
      %82 = dma.done [#allocation3], 256
    $region41: #{mlp_forward.1} parent=1 // pred_fallthru
      _
    // Predicated region
    $region42: #{mlp_forward.1} parent=1 // pred_check
      _
    $region43: #{mlp_forward.1} parent=1 // pred_check_branch
      %84 = sbr.rel (0) target = $region45
    $region44: #{mlp_forward.1} parent=1 // pred_region
      %86 = dma.done [#allocation5], 512
    $region45: #{mlp_forward.1} parent=1 // pred_fallthru
      _
    // Predicated region
    $region46: #{mlp_forward.1} parent=1 // pred_check
      _
    $region47: #{mlp_forward.1} parent=1 // pred_check_branch
      %88 = sbr.rel (0) target = $region49
    $region48: #{mlp_forward.1} parent=1 // pred_region
      %90 = dma.done [#allocation5], 512
    $region49: #{mlp_forward.1} parent=1 // pred_fallthru
      _
    // Predicated region
    $region50: #{mlp_forward.1} parent=1 // pred_check
      _
    $region51: #{mlp_forward.1} parent=1 // pred_check_branch
      %92 = sbr.rel (0) target = $region53
    $region52: #{mlp_forward.1} parent=1 // pred_region
      %94 = dma.done [#allocation8], 512
    $region53: #{mlp_forward.1} parent=1 // pred_fallthru
      _
    %v95 = vld [vmem:[%s0] sm:$0xff]
    %v96 = vld [vmem:[#allocation2] sm:$0xff]
    %v97 = vld [vmem:[#allocation2 + $0x8] sm:$0xff]
    %v98 = vld [vmem:[%s2] sm:$0x1]
    %v100 = vperm.slane %v98, 0
    %vm102 = vcmask 130048
    %v104 = vsel %vm102, %v95, 0
    %106 = vmatpush.msra.mxu0 0.0
    %107 = vmatpush.msra.mxu0 0.0
    %108 = vmatpush.msra.mxu0 0.0
    %109 = vmatpush.msra.mxu0 0.0
    %110 = vmatpush.msra.mxu0 0.0
    %111 = vmatpush.msra.mxu0 0.0
    %112 = vmatpush.msra.mxu0 0.0
    %113 = vmatpush.msra.mxu0 0.0
    %114 = vmatpush.msra.mxu0 0.0
    %115 = vmatpush.msra.mxu0 0.0
    %116 = vmatpush.msra.mxu0 0.0
    %117 = vmatpush.msra.mxu0 0.0
    %118 = vmatpush.msra.mxu0 0.0
    %119 = vmatpush.msra.mxu0 0.0
    %120 = vmatpush.msra.mxu0 %v97
    %121 = vmatpush.msra.mxu0 %v96
    %122 = vmatmul.f32.gmra.mxu0 %v104
    %v123 = vpop.f32.mrf.mxu0
    %v124 = vadd.f32 %v100, %v123
    %125 = vdwg.mxu0
    %v126 = vmax.f32 %v124, 0.0
    %v127 = vld [vmem:[#allocation4] sm:$0xff]
    %v128 = vld [vmem:[#allocation4 + $0x8] sm:$0xff]
    %v129 = vld [vmem:[#allocation4 + $0x10] sm:$0xff]
    %v130 = vld [vmem:[#allocation4 + $0x18] sm:$0xff]
    %v131 = vld [vmem:[%s4] sm:$0x1]
    %v133 = vperm.slane %v131, 0
    %vm135 = vcmask 261120
    %v137 = vsel %vm135, %v126, 0
    %139 = vmatpush.msra.mxu0 0.0
    %140 = vmatpush.msra.mxu0 0.0
    %141 = vmatpush.msra.mxu0 0.0
    %142 = vmatpush.msra.mxu0 0.0
    %143 = vmatpush.msra.mxu0 0.0
    %144 = vmatpush.msra.mxu0 0.0
    %145 = vmatpush.msra.mxu0 0.0
    %146 = vmatpush.msra.mxu0 0.0
    %147 = vmatpush.msra.mxu0 0.0
    %148 = vmatpush.msra.mxu0 0.0
    %149 = vmatpush.msra.mxu0 0.0
    %150 = vmatpush.msra.mxu0 0.0
    %151 = vmatpush.msra.mxu0 %v130
    %152 = vmatpush.msra.mxu0 %v129
    %153 = vmatpush.msra.mxu0 %v128
    %154 = vmatpush.msra.mxu0 %v127
    %155 = vmatmul.f32.gmra.mxu0 %v137
    %v156 = vpop.f32.mrf.mxu0
    %v157 = vadd.f32 %v133, %v156
    %158 = vdwg.mxu0
    %v159 = vmax.f32 %v157, 0.0
    %v160 = vld [vmem:[#allocation6] sm:$0xff]
    %v161 = vld [vmem:[#allocation6 + $0x8] sm:$0xff]
    %v162 = vld [vmem:[#allocation6 + $0x10] sm:$0xff]
    %v163 = vld [vmem:[#allocation6 + $0x18] sm:$0xff]
    %v164 = vld [vmem:[%s6] sm:$0x1]
    %v166 = vperm.slane %v164, 0
    %v169 = vsel %vm135, %v159, 0
    %171 = vmatpush.msra.mxu0 0.0
    %172 = vmatpush.msra.mxu0 0.0
    %173 = vmatpush.msra.mxu0 0.0
    %174 = vmatpush.msra.mxu0 0.0
    %175 = vmatpush.msra.mxu0 0.0
    %176 = vmatpush.msra.mxu0 0.0
    %177 = vmatpush.msra.mxu0 0.0
    %178 = vmatpush.msra.mxu0 0.0
    %179 = vmatpush.msra.mxu0 0.0
    %180 = vmatpush.msra.mxu0 0.0
    %181 = vmatpush.msra.mxu0 0.0
    %182 = vmatpush.msra.mxu0 0.0
    %183 = vmatpush.msra.mxu0 %v163
    %184 = vmatpush.msra.mxu0 %v162
    %185 = vmatpush.msra.mxu0 %v161
    %186 = vmatpush.msra.mxu0 %v160
    %187 = vmatmul.f32.gmra.mxu0 %v169
    %v188 = vpop.f32.mrf.mxu0
    %v189 = vadd.f32 %v166, %v188
    %190 = vdwg.mxu0
    %v191 = vmax.f32 %v189, 0.0
    %v192 = vld [vmem:[#allocation7] sm:$0xff]
    %v193 = vld [vmem:[#allocation7 + $0x8] sm:$0xff]
    %v194 = vld [vmem:[#allocation7 + $0x10] sm:$0xff]
    %v195 = vld [vmem:[#allocation7 + $0x18] sm:$0xff]
    %v196 = vld [vmem:[%s8] sm:$0x1]
    %v198 = vperm.slane %v196, 0
    %v201 = vsel %vm135, %v191, 0
    %203 = vmatpush.msra.mxu0 0.0
    %204 = vmatpush.msra.mxu0 0.0
    %205 = vmatpush.msra.mxu0 0.0
    %206 = vmatpush.msra.mxu0 0.0
    %207 = vmatpush.msra.mxu0 0.0
    %208 = vmatpush.msra.mxu0 0.0
    %209 = vmatpush.msra.mxu0 0.0
    %210 = vmatpush.msra.mxu0 0.0
    %211 = vmatpush.msra.mxu0 0.0
    %212 = vmatpush.msra.mxu0 0.0
    %213 = vmatpush.msra.mxu0 0.0
    %214 = vmatpush.msra.mxu0 0.0
    %215 = vmatpush.msra.mxu0 %v195
    %216 = vmatpush.msra.mxu0 %v194
    %217 = vmatpush.msra.mxu0 %v193
    %218 = vmatpush.msra.mxu0 %v192
    %219 = vmatmul.f32.gmra.mxu0 %v201
    %v220 = vpop.f32.mrf.mxu0
    %v221 = vadd.f32 %v198, %v220
    %222 = vdwg.mxu0
    %223 = vst [vmem:[%s9] sm:$0xff] %v221
    // Predicated region
    $region54: #{mlp_forward.1} parent=1 // pred_check
      _
    $region55: #{mlp_forward.1} parent=1 // pred_check_branch
      %225 = sbr.rel (0) target = $region57
    $region56: #{mlp_forward.1} parent=1 // pred_region
      _
    $region57: #{mlp_forward.1} parent=1 // pred_fallthru
      _
    // Predicated region
    $region58: #{mlp_forward.1} parent=1 // pred_check
      _
    $region59: #{mlp_forward.1} parent=1 // pred_check_branch
      %227 = sbr.rel (0) target = $region61
    $region60: #{mlp_forward.1} parent=1 // pred_region
      _
    $region61: #{mlp_forward.1} parent=1 // pred_fallthru
      _
    %228 = vsyncpa [#allocation3], 1
    %229 = vsyncpa [#allocation5], 1
    %230 = vsyncpa [#allocation8], 1

</llo_original>
